<compile_context>
chip_gen: v7x
topology: tpu7x:2x2x1
jax: 0.10.0
libtpu: 0.0.40
codegen_flags: <defaults>
</compile_context>

<pallas_src>
import jax
import jax.numpy as jnp
import numpy as np
from jax import lax
from jax.experimental import pallas as pl
from jax.experimental.pallas import tpu as pltpu


# ----------------------------- Pallas kernels ------------------------------ #

def _make_conv_stats_kernel(KH, KW, W):
    """Conv (in-kernel im2col, KH*KW accumulated MXU matmuls) + partial BN stats.

    Refs per grid step (n, j):
      x_ref : (1, 1, Cin, TPext)  halo'd flat spatial tile, bf16
      w_ref : (T, Cout, Cin)      branch-folded per-tap weights, bf16 (resident)
      m_ref : (1, T, TP)          per-tap boundary masks for this spatial tile, bf16
      o_ref : (1, Cout, TP)       conv output tile, bf16
      s_ref : (1, 1, Cout, 1)     per-(n, tile) channel sums, fp32
      ss_ref: (1, 1, Cout, 1)     per-(n, tile) channel sums of squares, fp32
    """
    def kernel(x_ref, w_ref, m_ref, o_ref, s_ref, ss_ref):
        Cout, TP = o_ref.shape[1], o_ref.shape[2]
        xw = x_ref[...][0, 0]          # (Cin, TPext) bf16
        wt = w_ref[...]                # (T, Cout, Cin) bf16
        mt = m_ref[...][0]             # (T, TP) bf16

        acc = jnp.zeros((Cout, TP), jnp.float32)
        t = 0
        for kh in range(KH):
            for kw in range(KW):
                off = kh * W + kw                               # static lane offset
                xs = xw[:, off:off + TP] * mt[t:t + 1, :]       # tap slice + boundary mask
                acc = acc + jnp.dot(wt[t], xs,
                                    preferred_element_type=jnp.float32)  # MXU accumulate
                t += 1

        o_ref[...] = acc.astype(o_ref.dtype)[None]              # bf16 conv_out tile
        s_ref[...] = jnp.sum(acc, axis=1, keepdims=True)[None, None]
        ss_ref[...] = jnp.sum(acc * acc, axis=1, keepdims=True)[None, None]

    return kernel


def _affine_relu_kernel(y_ref, sc_ref, sh_ref, o_ref):
    """Fused BN affine (precomputed scale/shift) + ReLU for one spatial tile.

    y_ref: (1, Cout, TP) bf16, sc_ref/sh_ref: (Cout, 1) fp32, o_ref: (1, Cout, TP) fp32.
    """
    y = y_ref[...][0].astype(jnp.float32)
    out = y * sc_ref[...] + sh_ref[...]                         # lane-broadcast per channel
    o_ref[...] = jnp.maximum(out, 0.0).astype(o_ref.dtype)[None]


# ------------------------------- wrapper ----------------------------------- #

def repvgg_block_forward(x_nchw, conv_w_oihw, gamma, beta, *,
                         kernel_size, stride=1, eps=1e-5):
    assert stride == 1, "demo kernel supports stride=1 (the module default)"
    N, Cin, H, W = x_nchw.shape
    Cout, Cin_tot, KH, KW = conv_w_oihw.shape
    kernels = Cin_tot // Cin
    p = (kernel_size - 1) // 2
    P = H * W
    T = KH * KW
    M = p * W + p                                   # flat halo on each side of a tile

    # --- spatial tile on the 128-lane axis; prefer >= 2 tiles so the grid pipelines ---
    TP = None
    for cand in (2048, 1024, 512, 256, 128):
        if P % cand == 0 and P // cand >= 2:
            TP = cand
            break
    if TP is None:
        for cand in (2048, 1024, 512, 256, 128):
            if P % cand == 0:
                TP = cand
                break
    if TP is None:
        TP = P                                      # fallback: one tile per image
    NT = P // TP
    TPext = TP + 2 * M

    # --- algebraic branch folding: conv(concat([x]*kernels), W) == conv(x, sum_b W_b) ---
    w_folded = conv_w_oihw.astype(jnp.float32).reshape(
        Cout, kernels, Cin, KH, KW).sum(axis=1)                     # (Cout, Cin, KH, KW)
    w_taps = jnp.transpose(w_folded, (2, 3, 0, 1)).reshape(
        T, Cout, Cin).astype(jnp.bfloat16)                          # (T, Cout, Cin)

    # --- glue: flatten spatial, add a flat zero halo, cut halo'd tiles (bf16) ---
    # ~1.27x input duplication instead of the old 9x im2col materialization.
    x_flat = x_nchw.astype(jnp.float32).reshape(N, Cin, P)
    x_ext = jnp.pad(x_flat, ((0, 0), (0, 0), (M, M)))
    x_tiles = jnp.stack([x_ext[:, :, j * TP: j * TP + TPext] for j in range(NT)],
                        axis=1).astype(jnp.bfloat16)                # (N, NT, Cin, TPext)

    # --- per-tap boundary-validity masks (host-side numpy, tiny) ---
    q = np.arange(P)
    hh, ww = q // W, q % W
    mnp = np.zeros((T, P), np.float32)
    t = 0
    for kh in range(KH):
        for kw in range(KW):
            dh, dw = kh - p, kw - p
            mnp[t] = ((hh + dh >= 0) & (hh + dh < H) &
                      (ww + dw >= 0) & (ww + dw < W)).astype(np.float32)
            t += 1
    masks = jnp.asarray(mnp.reshape(T, NT, TP).transpose(1, 0, 2),
                        dtype=jnp.bfloat16)                         # (NT, T, TP)

    conv_kernel = _make_conv_stats_kernel(KH, KW, W)

    # --- Pallas kernel 1: conv (in-kernel im2col) + partial BN statistics ---
    conv_out, sums, sumsq = pl.pallas_call(
        conv_kernel,
        out_shape=(jax.ShapeDtypeStruct((N, Cout, P), jnp.bfloat16),
                   jax.ShapeDtypeStruct((N, NT, Cout, 1), jnp.float32),
                   jax.ShapeDtypeStruct((N, NT, Cout, 1), jnp.float32)),
        grid=(N, NT),
        in_specs=[
            pl.BlockSpec((1, 1, Cin, TPext), lambda n, j: (n, j, 0, 0)),
            pl.BlockSpec((T, Cout, Cin), lambda n, j: (0, 0, 0)),   # resident weights
            pl.BlockSpec((1, T, TP), lambda n, j: (j, 0, 0)),
        ],
        out_specs=(
            pl.BlockSpec((1, Cout, TP), lambda n, j: (n, 0, j)),
            pl.BlockSpec((1, 1, Cout, 1), lambda n, j: (n, j, 0, 0)),
            pl.BlockSpec((1, 1, Cout, 1), lambda n, j: (n, j, 0, 0)),
        ),
        compiler_params=pltpu.CompilerParams(
            dimension_semantics=("parallel", "parallel")),
    )(x_tiles, w_taps, masks)

    # --- tiny cross-(batch, tile) reduction for the BN batch statistics (fp32) ---
    n_total = N * P
    gamma_f = gamma.astype(jnp.float32)
    beta_f = beta.astype(jnp.float32)
    mean = jnp.sum(sums[..., 0], axis=(0, 1)) / n_total             # (Cout,)
    ex2 = jnp.sum(sumsq[..., 0], axis=(0, 1)) / n_total
    var = jnp.maximum(ex2 - mean * mean, 0.0)                       # biased (training BN)
    inv = lax.rsqrt(var + eps)
    scale = (gamma_f * inv).reshape(Cout, 1)
    shift = (beta_f - mean * gamma_f * inv).reshape(Cout, 1)

    # --- Pallas kernel 2: fused BN affine + ReLU over the same (N, NT) tile grid ---
    out = pl.pallas_call(
        _affine_relu_kernel,
        out_shape=jax.ShapeDtypeStruct((N, Cout, P), jnp.float32),
        grid=(N, NT),
        in_specs=[
            pl.BlockSpec((1, Cout, TP), lambda n, j: (n, 0, j)),
            pl.BlockSpec((Cout, 1), lambda n, j: (0, 0)),
            pl.BlockSpec((Cout, 1), lambda n, j: (0, 0)),
        ],
        out_specs=pl.BlockSpec((1, Cout, TP), lambda n, j: (n, 0, j)),
        compiler_params=pltpu.CompilerParams(
            dimension_semantics=("parallel", "parallel")),
    )(conv_out, scale, shift)

    return out.reshape(N, Cout, H, W)      # flattened layout is already NCHW


# ------------------------------ reference ----------------------------------- #

def reference_forward(x_nchw, w_oihw, gamma, beta, *, kernel_size, eps=1e-5):
    Cin = x_nchw.shape[1]
    kernels = w_oihw.shape[1] // Cin
    pad = (kernel_size - 1) // 2
    xin = jnp.concatenate([x_nchw] * kernels, axis=1)
    conv = lax.conv_general_dilated(
        xin, w_oihw, window_strides=(1, 1),
        padding=((pad, pad), (pad, pad)),
        dimension_numbers=("NCHW", "OIHW", "NCHW"),
        precision=lax.Precision.HIGHEST)
    mean = jnp.mean(conv, axis=(0, 2, 3), keepdims=True)
    var = jnp.mean((conv - mean) ** 2, axis=(0, 2, 3), keepdims=True)
    y = (conv - mean) / jnp.sqrt(var + eps)
    y = y * gamma.reshape(1, -1, 1, 1) + beta.reshape(1, -1, 1, 1)
    return jnp.maximum(y, 0.0)


# --------------------------------- main ------------------------------------- #

if __name__ == "__main__":
    key = jax.random.PRNGKey(0)
    k1, k2 = jax.random.split(key)

    # Small shapes consistent with the module: in_ch=4, out_ch=8, k=3 -> kernels=3.
    N, Cin, H, W = 2, 4, 16, 16
    ksize = 3
    n_kernels = ksize // 2 + 2                 # = 3, per module __init__
    Cout = 8
    Cin_tot = Cin * n_kernels                  # = 12 (conv input channels)

    x = jax.random.normal(k1, (N, Cin, H, W), jnp.float32)
    conv_w = jax.random.normal(k2, (Cout, Cin_tot, ksize, ksize), jnp.float32) * 0.1
    gamma = jnp.ones((Cout,), jnp.float32)     # nn.BatchNorm2d default init
    beta = jnp.zeros((Cout,), jnp.float32)

    out = repvgg_block_forward(x, conv_w, gamma, beta, kernel_size=ksize)
    out = jax.block_until_ready(out)

    ref = reference_forward(x, conv_w, gamma, beta, kernel_size=ksize)
    np.testing.assert_allclose(np.asarray(out), np.asarray(ref), rtol=2e-2, atol=2e-2)
    assert out.shape == (N, Cout, H, W)

    print("KERNEL_OK")
</pallas_src>

<mosaic_0001>
module attributes {stable_mosaic.version = 11 : i64} {
  func.func @kernel(%arg0: i32, %arg1: i32, %arg2: memref<1x1x4x162xbf16, #tpu.memory_space<vmem>>, %arg3: memref<9x8x4xbf16, #tpu.memory_space<vmem>>, %arg4: memref<1x9x128xbf16, #tpu.memory_space<vmem>>, %arg5: memref<1x8x128xbf16, #tpu.memory_space<vmem>>, %arg6: memref<1x1x8x1xf32, #tpu.memory_space<vmem>>, %arg7: memref<1x1x8x1xf32, #tpu.memory_space<vmem>>) attributes {dimension_semantics = [#tpu.dimension_semantics<parallel>, #tpu.dimension_semantics<parallel>], iteration_bounds = array<i64: 2, 2>, scalar_prefetch = 0 : i64, scratch_operands = 0 : i64, tpu.core_type = #tpu.core_type<tc>, window_params = [{transform_indices = @transform_0, window_bounds = array<i64: 1, 1, 4, 162>}, {pipeline_mode = #tpu.pipeline_mode<synchronous>, transform_indices = @transform_1, window_bounds = array<i64: 9, 8, 4>}, {transform_indices = @transform_2, window_bounds = array<i64: 1, 9, 128>}, {transform_indices = @transform_3, window_bounds = array<i64: 1, 8, 128>}, {transform_indices = @transform_4, window_bounds = array<i64: 1, 1, 8, 1>}, {transform_indices = @transform_5, window_bounds = array<i64: 1, 1, 8, 1>}]} {
    %c0 = arith.constant 0 : index
    %c0_0 = arith.constant 0 : index
    %c0_1 = arith.constant 0 : index
    %c0_2 = arith.constant 0 : index
    %0 = vector.load %arg2[%c0, %c0_0, %c0_1, %c0_2] : memref<1x1x4x162xbf16, #tpu.memory_space<vmem>>, vector<1x1x4x162xbf16>
    %1 = vector.shape_cast %0 : vector<1x1x4x162xbf16> to vector<4x162xbf16>
    %c0_3 = arith.constant 0 : index
    %c0_4 = arith.constant 0 : index
    %c0_5 = arith.constant 0 : index
    %2 = vector.load %arg3[%c0_3, %c0_4, %c0_5] : memref<9x8x4xbf16, #tpu.memory_space<vmem>>, vector<9x8x4xbf16>
    %c0_6 = arith.constant 0 : index
    %c0_7 = arith.constant 0 : index
    %c0_8 = arith.constant 0 : index
    %3 = vector.load %arg4[%c0_6, %c0_7, %c0_8] : memref<1x9x128xbf16, #tpu.memory_space<vmem>>, vector<1x9x128xbf16>
    %4 = vector.shape_cast %3 : vector<1x9x128xbf16> to vector<9x128xbf16>
    %cst = arith.constant 0.000000e+00 : f32
    %5 = vector.broadcast %cst : f32 to vector<8x128xf32>
    %6 = vector.extract_strided_slice %1 {offsets = [0, 0], sizes = [4, 128], strides = [1, 1]} : vector<4x162xbf16> to vector<4x128xbf16>
    %7 = vector.extract_strided_slice %4 {offsets = [0, 0], sizes = [1, 128], strides = [1, 1]} : vector<9x128xbf16> to vector<1x128xbf16>
    %8 = vector.broadcast %7 : vector<1x128xbf16> to vector<4x128xbf16>
    %9 = arith.mulf %6, %8 : vector<4x128xbf16>
    %10 = vector.extract_strided_slice %2 {offsets = [0, 0, 0], sizes = [1, 8, 4], strides = [1, 1, 1]} : vector<9x8x4xbf16> to vector<1x8x4xbf16>
    %11 = vector.shape_cast %10 : vector<1x8x4xbf16> to vector<8x4xbf16>
    %cst_9 = arith.constant dense<0.000000e+00> : vector<8x128xf32>
    %12 = tpu.matmul %11, %9, %cst_9 {dimension_numbers = #tpu.dot_dimension_numbers<[1], [0], [0], [1], [0, 0, 1, 1], [], []>} : vector<8x4xbf16>, vector<4x128xbf16>, vector<8x128xf32> -> vector<8x128xf32>
    %13 = arith.addf %5, %12 : vector<8x128xf32>
    %14 = vector.extract_strided_slice %1 {offsets = [0, 1], sizes = [4, 128], strides = [1, 1]} : vector<4x162xbf16> to vector<4x128xbf16>
    %15 = vector.extract_strided_slice %4 {offsets = [1, 0], sizes = [1, 128], strides = [1, 1]} : vector<9x128xbf16> to vector<1x128xbf16>
    %16 = vector.broadcast %15 : vector<1x128xbf16> to vector<4x128xbf16>
    %17 = arith.mulf %14, %16 : vector<4x128xbf16>
    %18 = vector.extract_strided_slice %2 {offsets = [1, 0, 0], sizes = [1, 8, 4], strides = [1, 1, 1]} : vector<9x8x4xbf16> to vector<1x8x4xbf16>
    %19 = vector.shape_cast %18 : vector<1x8x4xbf16> to vector<8x4xbf16>
    %cst_10 = arith.constant dense<0.000000e+00> : vector<8x128xf32>
    %20 = tpu.matmul %19, %17, %cst_10 {dimension_numbers = #tpu.dot_dimension_numbers<[1], [0], [0], [1], [0, 0, 1, 1], [], []>} : vector<8x4xbf16>, vector<4x128xbf16>, vector<8x128xf32> -> vector<8x128xf32>
    %21 = arith.addf %13, %20 : vector<8x128xf32>
    %22 = vector.extract_strided_slice %1 {offsets = [0, 2], sizes = [4, 128], strides = [1, 1]} : vector<4x162xbf16> to vector<4x128xbf16>
    %23 = vector.extract_strided_slice %4 {offsets = [2, 0], sizes = [1, 128], strides = [1, 1]} : vector<9x128xbf16> to vector<1x128xbf16>
    %24 = vector.broadcast %23 : vector<1x128xbf16> to vector<4x128xbf16>
    %25 = arith.mulf %22, %24 : vector<4x128xbf16>
    %26 = vector.extract_strided_slice %2 {offsets = [2, 0, 0], sizes = [1, 8, 4], strides = [1, 1, 1]} : vector<9x8x4xbf16> to vector<1x8x4xbf16>
    %27 = vector.shape_cast %26 : vector<1x8x4xbf16> to vector<8x4xbf16>
    %cst_11 = arith.constant dense<0.000000e+00> : vector<8x128xf32>
    %28 = tpu.matmul %27, %25, %cst_11 {dimension_numbers = #tpu.dot_dimension_numbers<[1], [0], [0], [1], [0, 0, 1, 1], [], []>} : vector<8x4xbf16>, vector<4x128xbf16>, vector<8x128xf32> -> vector<8x128xf32>
    %29 = arith.addf %21, %28 : vector<8x128xf32>
    %30 = vector.extract_strided_slice %1 {offsets = [0, 16], sizes = [4, 128], strides = [1, 1]} : vector<4x162xbf16> to vector<4x128xbf16>
    %31 = vector.extract_strided_slice %4 {offsets = [3, 0], sizes = [1, 128], strides = [1, 1]} : vector<9x128xbf16> to vector<1x128xbf16>
    %32 = vector.broadcast %31 : vector<1x128xbf16> to vector<4x128xbf16>
    %33 = arith.mulf %30, %32 : vector<4x128xbf16>
    %34 = vector.extract_strided_slice %2 {offsets = [3, 0, 0], sizes = [1, 8, 4], strides = [1, 1, 1]} : vector<9x8x4xbf16> to vector<1x8x4xbf16>
    %35 = vector.shape_cast %34 : vector<1x8x4xbf16> to vector<8x4xbf16>
    %cst_12 = arith.constant dense<0.000000e+00> : vector<8x128xf32>
    %36 = tpu.matmul %35, %33, %cst_12 {dimension_numbers = #tpu.dot_dimension_numbers<[1], [0], [0], [1], [0, 0, 1, 1], [], []>} : vector<8x4xbf16>, vector<4x128xbf16>, vector<8x128xf32> -> vector<8x128xf32>
    %37 = arith.addf %29, %36 : vector<8x128xf32>
    %38 = vector.extract_strided_slice %1 {offsets = [0, 17], sizes = [4, 128], strides = [1, 1]} : vector<4x162xbf16> to vector<4x128xbf16>
    %39 = vector.extract_strided_slice %4 {offsets = [4, 0], sizes = [1, 128], strides = [1, 1]} : vector<9x128xbf16> to vector<1x128xbf16>
    %40 = vector.broadcast %39 : vector<1x128xbf16> to vector<4x128xbf16>
    %41 = arith.mulf %38, %40 : vector<4x128xbf16>
    %42 = vector.extract_strided_slice %2 {offsets = [4, 0, 0], sizes = [1, 8, 4], strides = [1, 1, 1]} : vector<9x8x4xbf16> to vector<1x8x4xbf16>
    %43 = vector.shape_cast %42 : vector<1x8x4xbf16> to vector<8x4xbf16>
    %cst_13 = arith.constant dense<0.000000e+00> : vector<8x128xf32>
    %44 = tpu.matmul %43, %41, %cst_13 {dimension_numbers = #tpu.dot_dimension_numbers<[1], [0], [0], [1], [0, 0, 1, 1], [], []>} : vector<8x4xbf16>, vector<4x128xbf16>, vector<8x128xf32> -> vector<8x128xf32>
    %45 = arith.addf %37, %44 : vector<8x128xf32>
    %46 = vector.extract_strided_slice %1 {offsets = [0, 18], sizes = [4, 128], strides = [1, 1]} : vector<4x162xbf16> to vector<4x128xbf16>
    %47 = vector.extract_strided_slice %4 {offsets = [5, 0], sizes = [1, 128], strides = [1, 1]} : vector<9x128xbf16> to vector<1x128xbf16>
    %48 = vector.broadcast %47 : vector<1x128xbf16> to vector<4x128xbf16>
    %49 = arith.mulf %46, %48 : vector<4x128xbf16>
    %50 = vector.extract_strided_slice %2 {offsets = [5, 0, 0], sizes = [1, 8, 4], strides = [1, 1, 1]} : vector<9x8x4xbf16> to vector<1x8x4xbf16>
    %51 = vector.shape_cast %50 : vector<1x8x4xbf16> to vector<8x4xbf16>
    %cst_14 = arith.constant dense<0.000000e+00> : vector<8x128xf32>
    %52 = tpu.matmul %51, %49, %cst_14 {dimension_numbers = #tpu.dot_dimension_numbers<[1], [0], [0], [1], [0, 0, 1, 1], [], []>} : vector<8x4xbf16>, vector<4x128xbf16>, vector<8x128xf32> -> vector<8x128xf32>
    %53 = arith.addf %45, %52 : vector<8x128xf32>
    %54 = vector.extract_strided_slice %1 {offsets = [0, 32], sizes = [4, 128], strides = [1, 1]} : vector<4x162xbf16> to vector<4x128xbf16>
    %55 = vector.extract_strided_slice %4 {offsets = [6, 0], sizes = [1, 128], strides = [1, 1]} : vector<9x128xbf16> to vector<1x128xbf16>
    %56 = vector.broadcast %55 : vector<1x128xbf16> to vector<4x128xbf16>
    %57 = arith.mulf %54, %56 : vector<4x128xbf16>
    %58 = vector.extract_strided_slice %2 {offsets = [6, 0, 0], sizes = [1, 8, 4], strides = [1, 1, 1]} : vector<9x8x4xbf16> to vector<1x8x4xbf16>
    %59 = vector.shape_cast %58 : vector<1x8x4xbf16> to vector<8x4xbf16>
    %cst_15 = arith.constant dense<0.000000e+00> : vector<8x128xf32>
    %60 = tpu.matmul %59, %57, %cst_15 {dimension_numbers = #tpu.dot_dimension_numbers<[1], [0], [0], [1], [0, 0, 1, 1], [], []>} : vector<8x4xbf16>, vector<4x128xbf16>, vector<8x128xf32> -> vector<8x128xf32>
    %61 = arith.addf %53, %60 : vector<8x128xf32>
    %62 = vector.extract_strided_slice %1 {offsets = [0, 33], sizes = [4, 128], strides = [1, 1]} : vector<4x162xbf16> to vector<4x128xbf16>
    %63 = vector.extract_strided_slice %4 {offsets = [7, 0], sizes = [1, 128], strides = [1, 1]} : vector<9x128xbf16> to vector<1x128xbf16>
    %64 = vector.broadcast %63 : vector<1x128xbf16> to vector<4x128xbf16>
    %65 = arith.mulf %62, %64 : vector<4x128xbf16>
    %66 = vector.extract_strided_slice %2 {offsets = [7, 0, 0], sizes = [1, 8, 4], strides = [1, 1, 1]} : vector<9x8x4xbf16> to vector<1x8x4xbf16>
    %67 = vector.shape_cast %66 : vector<1x8x4xbf16> to vector<8x4xbf16>
    %cst_16 = arith.constant dense<0.000000e+00> : vector<8x128xf32>
    %68 = tpu.matmul %67, %65, %cst_16 {dimension_numbers = #tpu.dot_dimension_numbers<[1], [0], [0], [1], [0, 0, 1, 1], [], []>} : vector<8x4xbf16>, vector<4x128xbf16>, vector<8x128xf32> -> vector<8x128xf32>
    %69 = arith.addf %61, %68 : vector<8x128xf32>
    %70 = vector.extract_strided_slice %1 {offsets = [0, 34], sizes = [4, 128], strides = [1, 1]} : vector<4x162xbf16> to vector<4x128xbf16>
    %71 = vector.extract_strided_slice %4 {offsets = [8, 0], sizes = [1, 128], strides = [1, 1]} : vector<9x128xbf16> to vector<1x128xbf16>
    %72 = vector.broadcast %71 : vector<1x128xbf16> to vector<4x128xbf16>
    %73 = arith.mulf %70, %72 : vector<4x128xbf16>
    %74 = vector.extract_strided_slice %2 {offsets = [8, 0, 0], sizes = [1, 8, 4], strides = [1, 1, 1]} : vector<9x8x4xbf16> to vector<1x8x4xbf16>
    %75 = vector.shape_cast %74 : vector<1x8x4xbf16> to vector<8x4xbf16>
    %cst_17 = arith.constant dense<0.000000e+00> : vector<8x128xf32>
    %76 = tpu.matmul %75, %73, %cst_17 {dimension_numbers = #tpu.dot_dimension_numbers<[1], [0], [0], [1], [0, 0, 1, 1], [], []>} : vector<8x4xbf16>, vector<4x128xbf16>, vector<8x128xf32> -> vector<8x128xf32>
    %77 = arith.addf %69, %76 : vector<8x128xf32>
    %78 = arith.truncf %77 : vector<8x128xf32> to vector<8x128xbf16>
    %79 = vector.shape_cast %78 : vector<8x128xbf16> to vector<1x8x128xbf16>
    %c0_18 = arith.constant 0 : index
    %c0_19 = arith.constant 0 : index
    %c0_20 = arith.constant 0 : index
    %80 = vector.load %arg5[%c0_18, %c0_19, %c0_20] : memref<1x8x128xbf16, #tpu.memory_space<vmem>>, vector<1x8x128xbf16>
    tpu.vector_store %arg5[%c0_18, %c0_19, %c0_20], %79 {strides = array<i32>} : memref<1x8x128xbf16, #tpu.memory_space<vmem>>, vector<1x8x128xbf16>,
    %cst_21 = arith.constant dense<0.000000e+00> : vector<8xf32>
    %81 = vector.multi_reduction <add>, %77, %cst_21 [1] : vector<8x128xf32> to vector<8xf32>
    %82 = vector.shape_cast %81 : vector<8xf32> to vector<8x1xf32>
    %83 = vector.shape_cast %82 : vector<8x1xf32> to vector<1x1x8x1xf32>
    %c0_22 = arith.constant 0 : index
    %c0_23 = arith.constant 0 : index
    %c0_24 = arith.constant 0 : index
    %c0_25 = arith.constant 0 : index
    %84 = vector.load %arg6[%c0_22, %c0_23, %c0_24, %c0_25] : memref<1x1x8x1xf32, #tpu.memory_space<vmem>>, vector<1x1x8x1xf32>
    tpu.vector_store %arg6[%c0_22, %c0_23, %c0_24, %c0_25], %83 {strides = array<i32>} : memref<1x1x8x1xf32, #tpu.memory_space<vmem>>, vector<1x1x8x1xf32>,
    %85 = arith.mulf %77, %77 : vector<8x128xf32>
    %cst_26 = arith.constant dense<0.000000e+00> : vector<8xf32>
    %86 = vector.multi_reduction <add>, %85, %cst_26 [1] : vector<8x128xf32> to vector<8xf32>
    %87 = vector.shape_cast %86 : vector<8xf32> to vector<8x1xf32>
    %88 = vector.shape_cast %87 : vector<8x1xf32> to vector<1x1x8x1xf32>
    %c0_27 = arith.constant 0 : index
    %c0_28 = arith.constant 0 : index
    %c0_29 = arith.constant 0 : index
    %c0_30 = arith.constant 0 : index
    %89 = vector.load %arg7[%c0_27, %c0_28, %c0_29, %c0_30] : memref<1x1x8x1xf32, #tpu.memory_space<vmem>>, vector<1x1x8x1xf32>
    tpu.vector_store %arg7[%c0_27, %c0_28, %c0_29, %c0_30], %88 {strides = array<i32>} : memref<1x1x8x1xf32, #tpu.memory_space<vmem>>, vector<1x1x8x1xf32>,
    return
  }
  func.func @transform_0(%arg0: i32, %arg1: i32) -> (i32, i32, i32, i32) {
    %c0_i32 = arith.constant 0 : i32
    %c0_i32_0 = arith.constant 0 : i32
    %c0_i32_1 = arith.constant 0 : i32
    return %arg0, %arg1, %c0_i32, %c0_i32_0 : i32, i32, i32, i32
  }
  func.func @transform_1(%arg0: i32, %arg1: i32) -> (i32, i32, i32) {
    %c0_i32 = arith.constant 0 : i32
    %c0_i32_0 = arith.constant 0 : i32
    %c0_i32_1 = arith.constant 0 : i32
    %c0_i32_2 = arith.constant 0 : i32
    return %c0_i32, %c0_i32_0, %c0_i32_1 : i32, i32, i32
  }
  func.func @transform_2(%arg0: i32, %arg1: i32) -> (i32, i32, i32) {
    %c0_i32 = arith.constant 0 : i32
    %c0_i32_0 = arith.constant 0 : i32
    %c0_i32_1 = arith.constant 0 : i32
    return %arg1, %c0_i32, %c0_i32_0 : i32, i32, i32
  }
  func.func @transform_3(%arg0: i32, %arg1: i32) -> (i32, i32, i32) {
    %c0_i32 = arith.constant 0 : i32
    %c0_i32_0 = arith.constant 0 : i32
    return %arg0, %c0_i32, %arg1 : i32, i32, i32
  }
  func.func @transform_4(%arg0: i32, %arg1: i32) -> (i32, i32, i32, i32) {
    %c0_i32 = arith.constant 0 : i32
    %c0_i32_0 = arith.constant 0 : i32
    %c0_i32_1 = arith.constant 0 : i32
    return %arg0, %arg1, %c0_i32, %c0_i32_0 : i32, i32, i32, i32
  }
  func.func @transform_5(%arg0: i32, %arg1: i32) -> (i32, i32, i32, i32) {
    %c0_i32 = arith.constant 0 : i32
    %c0_i32_0 = arith.constant 0 : i32
    %c0_i32_1 = arith.constant 0 : i32
    return %arg0, %arg1, %c0_i32, %c0_i32_0 : i32, i32, i32, i32
  }
}

</mosaic_0001>

<llo_original>
// kernel: tpu_custom_call.1
$region0: #{tpu_custom_call.1}
  #allocation0 [shape = 'u32[]', space=smem, size = 0x4, offset = 0x4, fixed_abs, tag = 'smem constant byte address 0x4 - core index']
  #allocation1 [shape = 'u32[144,128]{1,0:T(1,128)}', space=vmem, size = 0x12000, scoped, tag = 'internal scratch']
  %s0 = inlined_call_operand.vmem [shape: bf16[2,2,4,162], index: 0, kind: input, shape index: {}]
  %s1 = inlined_call_operand.vmem [shape: bf16[9,8,4], index: 1, kind: input, shape index: {}]
  %s2 = inlined_call_operand.vmem [shape: bf16[2,9,128], index: 2, kind: input, shape index: {}]
  %s3 = inlined_call_operand.hbm [shape: bf16[2,8,256], index: 3, kind: output, shape index: {0}]
  %s4 = inlined_call_operand.vmem [shape: f32[2,2,8,1], index: 4, kind: output, shape index: {1}]
  %s5 = inlined_call_operand.vmem [shape: f32[2,2,8,1], index: 5, kind: output, shape index: {2}]
  %6 = xla_tuple %s3, %s4, %s5
  %s7 = sld [smem:[#allocation0]]
  $region61: #{tpu_custom_call.1} parent=0
    _
  %s9 = ssub.s32 1, %s7
  %s10 = scalar_select 0, %s9, %s7
  $region1: #{tpu_custom_call.1} parent=0
    #allocation2 [shape = 'u8[4096]{0}', space=vmem, size = 0x1000, scoped, tag = 'output window, operand 0']
    #allocation3 [shape = 's32[2]{0}', space=sflag, size = 0x8, scoped, tag = 'scoped memory for tpu_custom_call.1']
    %11 = vsyncpa [#allocation3], 0
    %s12 = scalar_lea.sflag [#allocation3], 1
    %13 = vsyncpa %s12, 0
    loop: start=0, step=1, limit=6
    $region2: #{tpu_custom_call.1} parent=1 // loop_pre_header
      _
    $region3: #{tpu_custom_call.1} parent=1 // loop_header
      %s15 = sphi 0, %s19
      %p16 = scmp.ge.s32.totalorder %s15, 6
      %s22 = sphi 0, %s34
      %s23 = sphi 0, %s30
      %s24 = sphi 0, %s22
      %s25 = sphi 0, %s23
      %s26 = sphi 0, %s24
      %s27 = sphi 0, %s25
      %s39 = sphi 0, %s41
      %s42 = sphi 0, %s39
      %s43 = sphi 0, %s42
      %s59 = sphi 0, %s43
      %s63 = sphi 0, %s63
      %s65 = sphi 0, %s63
      %s66 = sphi 0, %s65
      %s80 = sphi 0, %s66
      %s86 = sphi 0, %s88
      %s89 = sphi 0, %s86
      %s90 = sphi 0, %s89
      %s106 = sphi 0, %s90
      %s114 = sphi 0, %s116
      %s117 = sphi 0, %s114
      %s118 = sphi 0, %s117
      %s134 = sphi 0, %s118
      %s142 = sphi 0, %s144
      %s145 = sphi 0, %s142
      %s146 = sphi 0, %s145
      %s162 = sphi 0, %s146
      %s170 = sphi 0, %s172
      %s173 = sphi 0, %s170
      %s174 = sphi 0, %s173
      %s190 = sphi 0, %s174
    $region4: #{tpu_custom_call.1} parent=1 // loop_header_branch
      %18 = sbr.rel (%p16) target = $region8
    $region5: #{tpu_custom_call.1} parent=1 // loop_body
      %s20 = ssub.s32 %s15, 1
      %s21 = ssub.s32 %s15, 2
      %s28 = sadd.s32 1, %s23
      %p29 = scmp.ge.s32.totalorder %s28, 2
      %s30 = scalar_select %p29, 0, %s28
      %s31 = sadd.s32 1, %s22
      %s32 = scalar_select %p29, %s31, %s22
      %p33 = scmp.ge.s32.totalorder %s32, 2
      %s34 = scalar_select %p33, 0, %s32
      %s35 = ssub.s32 %s22, %s34
      %s36 = ssub.s32 %s23, %s30
      %s37 = sor.u32 %s35, %s36
      %p38 = scmp.eq.s32.totalorder %s37, 0
      %s40 = sadd.s32 %s39, 1
      %s41 = scalar_select %p38, %s39, %s40
      %p44 = pneg %p38
      %p45 = scmp.eq.s32.totalorder %s15, 3
      %p46 = por %p44, %p45
      %p47 = scmp.ne.s32.totalorder %s39, %s42
      %p48 = scmp.eq.s32.totalorder %s15, 0
      %p49 = por %p47, %p48
      %p50 = scmp.ne.s32.totalorder %s39, %s42
      %p51 = scmp.eq.s32.totalorder %s20, 3
      %p52 = por %p50, %p51
      %p53 = scmp.ne.s32.totalorder %s42, %s43
      %p54 = scmp.eq.s32.totalorder %s20, 0
      %p55 = por %p53, %p54
      %p56 = scmp.ne.s32.totalorder %s42, %s43
      %p57 = scmp.eq.s32.totalorder %s21, 3
      %p58 = por %p56, %p57
      %p60 = scmp.ne.s32.totalorder %s43, %s59
      %p61 = scmp.eq.s32.totalorder %s21, 0
      %p62 = por %p60, %p61
      %s64 = sadd.s32 %s63, 1
      %p67 = scmp.eq.s32.totalorder %s15, 3
      %p68 = scmp.ne.s32.totalorder %s63, %s65
      %p69 = scmp.eq.s32.totalorder %s15, 0
      %p70 = por %p68, %p69
      %p71 = scmp.ne.s32.totalorder %s63, %s65
      %p72 = scmp.eq.s32.totalorder %s20, 3
      %p73 = por %p71, %p72
      %p74 = scmp.ne.s32.totalorder %s65, %s66
      %p75 = scmp.eq.s32.totalorder %s20, 0
      %p76 = por %p74, %p75
      %p77 = scmp.ne.s32.totalorder %s65, %s66
      %p78 = scmp.eq.s32.totalorder %s21, 3
      %p79 = por %p77, %p78
      %p81 = scmp.ne.s32.totalorder %s66, %s80
      %p82 = scmp.eq.s32.totalorder %s21, 0
      %p83 = por %p81, %p82
      %s84 = ssub.s32 %s23, %s30
      %p85 = scmp.eq.s32.totalorder %s84, 0
      %s87 = sadd.s32 %s86, 1
      %s88 = scalar_select %p85, %s86, %s87
      %p91 = pneg %p85
      %p92 = scmp.eq.s32.totalorder %s15, 3
      %p93 = por %p91, %p92
      %p94 = scmp.ne.s32.totalorder %s86, %s89
      %p95 = scmp.eq.s32.totalorder %s15, 0
      %p96 = por %p94, %p95
      %p97 = scmp.ne.s32.totalorder %s86, %s89
      %p98 = scmp.eq.s32.totalorder %s20, 3
      %p99 = por %p97, %p98
      %p100 = scmp.ne.s32.totalorder %s89, %s90
      %p101 = scmp.eq.s32.totalorder %s20, 0
      %p102 = por %p100, %p101
      %p103 = scmp.ne.s32.totalorder %s89, %s90
      %p104 = scmp.eq.s32.totalorder %s21, 3
      %p105 = por %p103, %p104
      %p107 = scmp.ne.s32.totalorder %s90, %s106
      %p108 = scmp.eq.s32.totalorder %s21, 0
      %p109 = por %p107, %p108
      %s110 = ssub.s32 %s22, %s34
      %s111 = ssub.s32 %s23, %s30
      %s112 = sor.u32 %s110, %s111
      %p113 = scmp.eq.s32.totalorder %s112, 0
      %s115 = sadd.s32 %s114, 1
      %s116 = scalar_select %p113, %s114, %s115
      %p119 = pneg %p113
      %p120 = scmp.eq.s32.totalorder %s15, 3
      %p121 = por %p119, %p120
      %p122 = scmp.ne.s32.totalorder %s114, %s117
      %p123 = scmp.eq.s32.totalorder %s15, 0
      %p124 = por %p122, %p123
      %p125 = scmp.ne.s32.totalorder %s114, %s117
      %p126 = scmp.eq.s32.totalorder %s20, 3
      %p127 = por %p125, %p126
      %p128 = scmp.ne.s32.totalorder %s117, %s118
      %p129 = scmp.eq.s32.totalorder %s20, 0
      %p130 = por %p128, %p129
      %p131 = scmp.ne.s32.totalorder %s117, %s118
      %p132 = scmp.eq.s32.totalorder %s21, 3
      %p133 = por %p131, %p132
      %p135 = scmp.ne.s32.totalorder %s118, %s134
      %p136 = scmp.eq.s32.totalorder %s21, 0
      %p137 = por %p135, %p136
      %s138 = ssub.s32 %s22, %s34
      %s139 = ssub.s32 %s23, %s30
      %s140 = sor.u32 %s138, %s139
      %p141 = scmp.eq.s32.totalorder %s140, 0
      %s143 = sadd.s32 %s142, 1
      %s144 = scalar_select %p141, %s142, %s143
      %p147 = pneg %p141
      %p148 = scmp.eq.s32.totalorder %s15, 3
      %p149 = por %p147, %p148
      %p150 = scmp.ne.s32.totalorder %s142, %s145
      %p151 = scmp.eq.s32.totalorder %s15, 0
      %p152 = por %p150, %p151
      %p153 = scmp.ne.s32.totalorder %s142, %s145
      %p154 = scmp.eq.s32.totalorder %s20, 3
      %p155 = por %p153, %p154
      %p156 = scmp.ne.s32.totalorder %s145, %s146
      %p157 = scmp.eq.s32.totalorder %s20, 0
      %p158 = por %p156, %p157
      %p159 = scmp.ne.s32.totalorder %s145, %s146
      %p160 = scmp.eq.s32.totalorder %s21, 3
      %p161 = por %p159, %p160
      %p163 = scmp.ne.s32.totalorder %s146, %s162
      %p164 = scmp.eq.s32.totalorder %s21, 0
      %p165 = por %p163, %p164
      %s166 = ssub.s32 %s22, %s34
      %s167 = ssub.s32 %s23, %s30
      %s168 = sor.u32 %s166, %s167
      %p169 = scmp.eq.s32.totalorder %s168, 0
      %s171 = sadd.s32 %s170, 1
      %s172 = scalar_select %p169, %s170, %s171
      %p175 = pneg %p169
      %p176 = scmp.eq.s32.totalorder %s15, 3
      %p177 = por %p175, %p176
      %p178 = scmp.ne.s32.totalorder %s170, %s173
      %p179 = scmp.eq.s32.totalorder %s15, 0
      %p180 = por %p178, %p179
      %p181 = scmp.ne.s32.totalorder %s170, %s173
      %p182 = scmp.eq.s32.totalorder %s20, 3
      %p183 = por %p181, %p182
      %p184 = scmp.ne.s32.totalorder %s173, %s174
      %p185 = scmp.eq.s32.totalorder %s20, 0
      %p186 = por %p184, %p185
      %p187 = scmp.ne.s32.totalorder %s173, %s174
      %p188 = scmp.eq.s32.totalorder %s21, 3
      %p189 = por %p187, %p188
      %p191 = scmp.ne.s32.totalorder %s174, %s190
      %p192 = scmp.eq.s32.totalorder %s21, 0
      %p193 = por %p191, %p192
      %p194 = scmp.le.s32.totalorder 1, %s15
      %p195 = scmp.lt.s32.totalorder %s15, 5
      %p196 = pnand %p194, %p195
      %p197 = pneg %p196
      // Predicated region
      $region9: #{tpu_custom_call.1} parent=5 // pred_check
        _
      $region10: #{tpu_custom_call.1} parent=5 // pred_check_branch
        %199 = sbr.rel (%p196) target = $region12
      $region11: #{tpu_custom_call.1} parent=5 // pred_region
        %s200 = ssub.s32 %s15, 1
        // Predicated region
        $region13: #{tpu_custom_call.1} parent=11 // pred_check
          %p201 = pneg %p76
        $region14: #{tpu_custom_call.1} parent=11 // pred_check_branch
          %203 = sbr.rel (%p201) target = $region16
        $region15: #{tpu_custom_call.1} parent=11 // pred_region
          _
        $region16: #{tpu_custom_call.1} parent=11 // pred_fallthru
          _
      $region12: #{tpu_custom_call.1} parent=5 // pred_fallthru
        _
      %p204 = scmp.lt.s32.totalorder %s15, 4
      // Predicated region
      $region17: #{tpu_custom_call.1} parent=5 // pred_check
        %p205 = pneg %p204
      $region18: #{tpu_custom_call.1} parent=5 // pred_check_branch
        %207 = sbr.rel (%p205) target = $region20
      $region19: #{tpu_custom_call.1} parent=5 // pred_region
        // Predicated region
        $region21: #{tpu_custom_call.1} parent=19 // pred_check
          %p208 = pneg %p49
        $region22: #{tpu_custom_call.1} parent=19 // pred_check_branch
          %210 = sbr.rel (%p208) target = $region24
        $region23: #{tpu_custom_call.1} parent=19 // pred_region
          %p211 = scmp.lt.s32.totalorder %s22, 1
          %s212 = scalar_select %p211, %s22, 1
          %p213 = scmp.lt.s32.totalorder %s23, 1
          %s214 = scalar_select %p213, %s23, 1
          %s215 = smul.addr %s214, 2
          %s216 = smul.addr %s212, 4
          %s217 = sadd.s32 %s215, %s216
          %s218 = smul.addr %s217, 2
          %s219 = scalar_lea.vmem %s0, %s218
        $region24: #{tpu_custom_call.1} parent=19 // pred_fallthru
          _
        // Predicated region
        $region25: #{tpu_custom_call.1} parent=19 // pred_check
          %p220 = pneg %p96
        $region26: #{tpu_custom_call.1} parent=19 // pred_check_branch
          %222 = sbr.rel (%p220) target = $region28
        $region27: #{tpu_custom_call.1} parent=19 // pred_region
          %p223 = scmp.lt.s32.totalorder %s23, 1
          %s224 = scalar_select %p223, %s23, 1
          %s225 = smul.addr %s224, 2
          %s226 = smul.addr %s225, 4
          %s227 = scalar_lea.vmem %s2, %s226
        $region28: #{tpu_custom_call.1} parent=19 // pred_fallthru
          _
      $region20: #{tpu_custom_call.1} parent=5 // pred_fallthru
        _
      %p228 = scmp.le.s32.totalorder 1, %s15
      %p229 = scmp.lt.s32.totalorder %s15, 5
      %p230 = pnand %p228, %p229
      %p231 = pneg %p230
      // Predicated region
      $region29: #{tpu_custom_call.1} parent=5 // pred_check
        _
      $region30: #{tpu_custom_call.1} parent=5 // pred_check_branch
        %233 = sbr.rel (%p230) target = $region32
      $region31: #{tpu_custom_call.1} parent=5 // pred_region
        %s234 = ssub.s32 %s15, 1
        %p235 = scmp.lt.s32.totalorder %s24, 1
        %s236 = scalar_select %p235, %s24, 1
        %p237 = scmp.lt.s32.totalorder %s25, 1
        %s238 = scalar_select %p237, %s25, 1
        %s239 = smul.addr %s238, 2
        %s240 = smul.addr %s236, 4
        %s241 = sadd.s32 %s239, %s240
        %s242 = smul.addr %s241, 2
        %s243 = scalar_lea.vmem %s0, %s242
        %p244 = pneg %p55
        %p245 = pneg %p52
        %p246 = pneg %p76
        %p247 = pneg %p73
        %p248 = scmp.lt.s32.totalorder %s25, 1
        %s249 = scalar_select %p248, %s25, 1
        %s250 = smul.addr %s249, 2
        %s251 = smul.addr %s250, 4
        %s252 = scalar_lea.vmem %s2, %s251
        %p253 = pneg %p102
        %p254 = pneg %p99
        %p255 = pneg %p130
        %p256 = pneg %p127
        %s257 = sand.u32 %s117, 1
        %s258 = scalar_lea.sflag [#allocation3], %s257
        %s259 = sand.u32 %s117, 1
        %s260 = smul.addr %s259, 4
        %s261 = scalar_lea.vmem [#allocation2], %s260
        %p262 = pneg %p158
        %p263 = pneg %p155
        %p264 = scmp.lt.s32.totalorder %s24, 1
        %s265 = scalar_select %p264, %s24, 1
        %p266 = scmp.lt.s32.totalorder %s25, 1
        %s267 = scalar_select %p266, %s25, 1
        %s268 = smul.addr %s265, 2
        %s269 = sadd.s32 %s267, %s268
        %s270 = smul.addr %s269, 8
        %s271 = scalar_lea.vmem %s4, %s270
        %p272 = pneg %p186
        %p273 = pneg %p183
        %p274 = scmp.lt.s32.totalorder %s24, 1
        %s275 = scalar_select %p274, %s24, 1
        %p276 = scmp.lt.s32.totalorder %s25, 1
        %s277 = scalar_select %p276, %s25, 1
        %s278 = smul.addr %s275, 2
        %s279 = sadd.s32 %s277, %s278
        %s280 = smul.addr %s279, 8
        %s281 = scalar_lea.vmem %s5, %s280
        %p282 = scmp.lt.s32.totalorder %s24, 1
        %s283 = scalar_select %p282, %s24, 1
        %p284 = scmp.lt.s32.totalorder %s25, 1
        %s285 = scalar_select %p284, %s25, 1
        %s286 = smul.addr %s285, 2
        %s287 = smul.addr %s283, 4
        %s288 = sadd.s32 %s286, %s287
        %s289 = smul.addr %s288, 2
        %s290 = scalar_lea.vmem %s0, %s289
        %p291 = scmp.lt.s32.totalorder %s25, 1
        %s292 = scalar_select %p291, %s25, 1
        %s293 = smul.addr %s292, 2
        %s294 = smul.addr %s293, 4
        %s295 = scalar_lea.vmem %s2, %s294
        %p296 = scmp.lt.s32.totalorder %s24, 1
        %s297 = scalar_select %p296, %s24, 1
        %p298 = scmp.lt.s32.totalorder %s25, 1
        %s299 = scalar_select %p298, %s25, 1
        %s300 = smul.addr %s297, 2
        %s301 = sadd.s32 %s299, %s300
        %s302 = smul.addr %s301, 8
        %s303 = scalar_lea.vmem %s4, %s302
        %p304 = scmp.lt.s32.totalorder %s24, 1
        %s305 = scalar_select %p304, %s24, 1
        %p306 = scmp.lt.s32.totalorder %s25, 1
        %s307 = scalar_select %p306, %s25, 1
        %s308 = smul.addr %s305, 2
        %s309 = sadd.s32 %s307, %s308
        %s310 = smul.addr %s309, 8
        %s311 = scalar_lea.vmem %s5, %s310
        %v313 = vld [vmem:[%s290] sm:$0xf]
        %v314 = vld [vmem:[%s1] sm:$0xf]
        %v315 = vld [vmem:[%s1 + $0x4] sm:$0xf]
        %v316 = vld [vmem:[%s1 + $0x8] sm:$0xf]
        %v317 = vld [vmem:[%s1 + $0xc] sm:$0xf]
        %v318 = vld [vmem:[%s1 + $0x10] sm:$0xf]
        %v319 = vld [vmem:[%s1 + $0x14] sm:$0xf]
        %v320 = vld [vmem:[%s1 + $0x18] sm:$0xf]
        %v321 = vld [vmem:[%s1 + $0x1c] sm:$0xf]
        %v322 = vld [vmem:[%s1 + $0x20] sm:$0xf]
        %v323 = vld [vmem:[%s295] sm:$0xf]
        %v324 = vld [vmem:[%s295 + $0x4] sm:$0x1]
        %v326 = vpack.i.b16 %v323, %v323
        %v328 = vlaneseq
        %v329 = vshrl.u32 %v328, 7
        %v330 = vsub.s32 0, %v329
        %v331 = vrot.slane %v326, %v330
        %v332 = vmul.bf16 %v313, %v331
        %v333 = vshrl.u32 %v323, 16
        %v334 = vpack.i.b16 %v333, %v333
        %v336 = vlaneseq
        %v337 = vshrl.u32 %v336, 7
        %v338 = vsub.s32 0, %v337
        %v339 = vrot.slane %v334, %v338
        %v342 = vunpack.c.l.s4 1983009808
        %v343 = vunpack.c.0.s8 %v342
        %v344 = vlaneseq
        %v345 = vshrl.u32 %v344, 7
        %v346 = vsub.s32 %v343, %v345
        %v347 = vrot.slane %v339, %v346
        %348 = vrot.lane.b32.xlu0 %v347, 1
        %v349 = vpop.permute.xlu0 %348
        %v350 = vrot.slane %v349, 6
        %vm351 = vcmask 7168
        %v352 = vsel %vm351, %v350, %v349
        %v354 = vmul.bf16 %v313, %v352
        %v357 = vunpack.c.l.s4 1983009808
        %v358 = vunpack.c.0.s8 %v357
        %v359 = vlaneseq
        %v360 = vshrl.u32 %v359, 7
        %v361 = vsub.s32 %v358, %v360
        %v362 = vrot.slane %v354, %v361
        %v363 = vcombine.high %v362, %v362
        %364 = vrot.lane.b32.xlu0 %v362, 127
        %v365 = vpop.permute.xlu0 %364
        %366 = vrot.lane.b32.xlu0 %v363, 127
        %v367 = vpop.permute.xlu0 %366
        %vm368 = vcmask 1039360
        %v369 = vsel %vm368, %v365, %v367
        %vm370 = vcmask 31744
        %v372 = vsel %vm370, %v315, 0
        %vm374 = vcmask 1041408
        %v376 = vsel %vm374, %v369, 0
        %378 = vmatprep.subr.bf16.mxu0 0
        %379 = vmatpush1.bf16.msra.mxu0 %v376
        %380 = vmatprep.subr.bf16.mxu0 0
        %381 = vmatpush1.bf16.msra.mxu0 0
        %382 = vmatprep.subr.bf16.mxu0 0
        %383 = vmatpush1.bf16.msra.mxu0 0
        %384 = vmatprep.subr.bf16.mxu0 0
        %385 = vmatpush1.bf16.msra.mxu0 0
        %386 = vmatprep.subr.bf16.mxu0 0
        %387 = vmatpush1.bf16.msra.mxu0 0
        %388 = vmatprep.subr.bf16.mxu0 0
        %389 = vmatpush1.bf16.msra.mxu0 0
        %390 = vmatprep.subr.bf16.mxu0 0
        %391 = vmatpush1.bf16.msra.mxu0 0
        %392 = vmatprep.subr.bf16.mxu0 0
        %393 = vmatpush1.bf16.msra.mxu0 0
        %394 = vmatprep.subr.bf16.mxu0 0
        %395 = vmatpush1.bf16.msra.mxu0 0
        %396 = vmatprep.subr.bf16.mxu0 0
        %397 = vmatpush1.bf16.msra.mxu0 0
        %398 = vmatprep.subr.bf16.mxu0 0
        %399 = vmatpush1.bf16.msra.mxu0 0
        %400 = vmatprep.subr.bf16.mxu0 0
        %401 = vmatpush1.bf16.msra.mxu0 0
        %402 = vmatprep.subr.bf16.mxu0 0
        %403 = vmatpush1.bf16.msra.mxu0 0
        %404 = vmatprep.subr.bf16.mxu0 0
        %405 = vmatpush1.bf16.msra.mxu0 0
        %406 = vmatprep.subr.bf16.mxu0 0
        %407 = vmatpush1.bf16.msra.mxu0 0
        %408 = vmatprep.subr.bf16.mxu0 0
        %409 = vmatpush1.bf16.msra.mxu0 0
        %410 = vmatprep.mubr.bf16.mxu0 0
        %411 = vmatmul.mubr.bf16.gmra.mrb[0].mxu0 %v372
        %v412 = vpop.f32.mrb[0].mxu0
        %v413 = vadd.f32 0.0, %v412
        %v414 = vpop.f32.mrb[0].mxu0
        %v415 = vpop.f32.mrb[0].mxu0
        %v416 = vpop.f32.mrb[0].mxu0
        %417 = vdwg.mxu0
        %v419 = vsel %vm370, %v314, 0
        %v422 = vsel %vm374, %v332, 0
        %424 = vmatprep.subr.bf16.mxu0 0
        %425 = vmatpush1.bf16.msra.mxu0 %v422
        %426 = vmatprep.subr.bf16.mxu0 0
        %427 = vmatpush1.bf16.msra.mxu0 0
        %428 = vmatprep.subr.bf16.mxu0 0
        %429 = vmatpush1.bf16.msra.mxu0 0
        %430 = vmatprep.subr.bf16.mxu0 0
        %431 = vmatpush1.bf16.msra.mxu0 0
        %432 = vmatprep.subr.bf16.mxu0 0
        %433 = vmatpush1.bf16.msra.mxu0 0
        %434 = vmatprep.subr.bf16.mxu0 0
        %435 = vmatpush1.bf16.msra.mxu0 0
        %436 = vmatprep.subr.bf16.mxu0 0
        %437 = vmatpush1.bf16.msra.mxu0 0
        %438 = vmatprep.subr.bf16.mxu0 0
        %439 = vmatpush1.bf16.msra.mxu0 0
        %440 = vmatprep.subr.bf16.mxu0 0
        %441 = vmatpush1.bf16.msra.mxu0 0
        %442 = vmatprep.subr.bf16.mxu0 0
        %443 = vmatpush1.bf16.msra.mxu0 0
        %444 = vmatprep.subr.bf16.mxu0 0
        %445 = vmatpush1.bf16.msra.mxu0 0
        %446 = vmatprep.subr.bf16.mxu0 0
        %447 = vmatpush1.bf16.msra.mxu0 0
        %448 = vmatprep.subr.bf16.mxu0 0
        %449 = vmatpush1.bf16.msra.mxu0 0
        %450 = vmatprep.subr.bf16.mxu0 0
        %451 = vmatpush1.bf16.msra.mxu0 0
        %452 = vmatprep.subr.bf16.mxu0 0
        %453 = vmatpush1.bf16.msra.mxu0 0
        %454 = vmatprep.subr.bf16.mxu0 0
        %455 = vmatpush1.bf16.msra.mxu0 0
        %456 = vmatprep.mubr.bf16.mxu0 0
        %457 = vmatmul.mubr.bf16.gmra.mrb[0].mxu0 %v419
        %v458 = vpop.f32.mrb[0].mxu0
        %v459 = vadd.f32 %v413, %v458
        %v460 = vpop.f32.mrb[0].mxu0
        %v461 = vpop.f32.mrb[0].mxu0
        %v462 = vpop.f32.mrb[0].mxu0
        %463 = vdwg.mxu0
        %v464 = vlaneseq
        %v465 = vshrl.u32 %v464, 7
        %v466 = vsub.s32 1, %v465
        %v467 = vrot.slane %v326, %v466
        %v470 = vunpack.c.l.s4 1983009808
        %v471 = vunpack.c.0.s8 %v470
        %v472 = vlaneseq
        %v473 = vshrl.u32 %v472, 7
        %v474 = vsub.s32 %v471, %v473
        %v475 = vrot.slane %v467, %v474
        %476 = vrot.lane.b32.xlu0 %v475, 2
        %v477 = vpop.permute.xlu0 %476
        %v478 = vrot.slane %v477, 6
        %vm479 = vcmask 15360
        %v480 = vsel %vm479, %v478, %v477
        %v482 = vmul.bf16 %v313, %v480
        %v485 = vunpack.c.l.s4 1983009808
        %v486 = vunpack.c.0.s8 %v485
        %v487 = vlaneseq
        %v488 = vshrl.u32 %v487, 7
        %v489 = vsub.s32 %v486, %v488
        %v490 = vrot.slane %v482, %v489
        %v491 = vcombine.high %v490, %v490
        %492 = vrot.lane.b32.xlu0 %v490, 126
        %v493 = vpop.permute.xlu0 %492
        %494 = vrot.lane.b32.xlu0 %v491, 126
        %v495 = vpop.permute.xlu0 %494
        %vm496 = vcmask 1031168
        %v497 = vsel %vm496, %v493, %v495
        %v499 = vsel %vm370, %v316, 0
        %v502 = vsel %vm374, %v497, 0
        %504 = vmatprep.subr.bf16.mxu0 0
        %505 = vmatpush1.bf16.msra.mxu0 %v502
        %506 = vmatprep.subr.bf16.mxu0 0
        %507 = vmatpush1.bf16.msra.mxu0 0
        %508 = vmatprep.subr.bf16.mxu0 0
        %509 = vmatpush1.bf16.msra.mxu0 0
        %510 = vmatprep.subr.bf16.mxu0 0
        %511 = vmatpush1.bf16.msra.mxu0 0
        %512 = vmatprep.subr.bf16.mxu0 0
        %513 = vmatpush1.bf16.msra.mxu0 0
        %514 = vmatprep.subr.bf16.mxu0 0
        %515 = vmatpush1.bf16.msra.mxu0 0
        %516 = vmatprep.subr.bf16.mxu0 0
        %517 = vmatpush1.bf16.msra.mxu0 0
        %518 = vmatprep.subr.bf16.mxu0 0
        %519 = vmatpush1.bf16.msra.mxu0 0
        %520 = vmatprep.subr.bf16.mxu0 0
        %521 = vmatpush1.bf16.msra.mxu0 0
        %522 = vmatprep.subr.bf16.mxu0 0
        %523 = vmatpush1.bf16.msra.mxu0 0
        %524 = vmatprep.subr.bf16.mxu0 0
        %525 = vmatpush1.bf16.msra.mxu0 0
        %526 = vmatprep.subr.bf16.mxu0 0
        %527 = vmatpush1.bf16.msra.mxu0 0
        %528 = vmatprep.subr.bf16.mxu0 0
        %529 = vmatpush1.bf16.msra.mxu0 0
        %530 = vmatprep.subr.bf16.mxu0 0
        %531 = vmatpush1.bf16.msra.mxu0 0
        %532 = vmatprep.subr.bf16.mxu0 0
        %533 = vmatpush1.bf16.msra.mxu0 0
        %534 = vmatprep.subr.bf16.mxu0 0
        %535 = vmatpush1.bf16.msra.mxu0 0
        %536 = vmatprep.mubr.bf16.mxu0 0
        %537 = vmatmul.mubr.bf16.gmra.mrb[0].mxu0 %v499
        %v538 = vpop.f32.mrb[0].mxu0
        %v539 = vadd.f32 0.0, %v538
        %v540 = vpop.f32.mrb[0].mxu0
        %v541 = vpop.f32.mrb[0].mxu0
        %v542 = vpop.f32.mrb[0].mxu0
        %543 = vdwg.mxu0
        %v544 = vadd.f32 %v459, %v539
        %v545 = vlaneseq
        %v546 = vshrl.u32 %v545, 7
        %v547 = vsub.s32 1, %v546
        %v548 = vrot.slane %v334, %v547
        %v551 = vunpack.c.l.s4 1983009808
        %v552 = vunpack.c.0.s8 %v551
        %v553 = vlaneseq
        %v554 = vshrl.u32 %v553, 7
        %v555 = vsub.s32 %v552, %v554
        %v556 = vrot.slane %v548, %v555
        %557 = vrot.lane.b32.xlu0 %v556, 16
        %v558 = vpop.permute.xlu0 %557
        %v559 = vrot.slane %v558, 6
        %vm560 = vcmask 130048
        %v561 = vsel %vm560, %v559, %v558
        %v563 = vmul.bf16 %v313, %v561
        %v566 = vunpack.c.l.s4 1983009808
        %v567 = vunpack.c.0.s8 %v566
        %v568 = vlaneseq
        %v569 = vshrl.u32 %v568, 7
        %v570 = vsub.s32 %v567, %v569
        %v571 = vrot.slane %v563, %v570
        %v572 = vcombine.high %v571, %v571
        %573 = vrot.lane.b32.xlu0 %v571, 112
        %v574 = vpop.permute.xlu0 %573
        %575 = vrot.lane.b32.xlu0 %v572, 112
        %v576 = vpop.permute.xlu0 %575
        %vm577 = vcmask 916480
        %v578 = vsel %vm577, %v574, %v576
        %v580 = vsel %vm370, %v317, 0
        %v583 = vsel %vm374, %v578, 0
        %585 = vmatprep.subr.bf16.mxu0 0
        %586 = vmatpush1.bf16.msra.mxu0 %v583
        %587 = vmatprep.subr.bf16.mxu0 0
        %588 = vmatpush1.bf16.msra.mxu0 0
        %589 = vmatprep.subr.bf16.mxu0 0
        %590 = vmatpush1.bf16.msra.mxu0 0
        %591 = vmatprep.subr.bf16.mxu0 0
        %592 = vmatpush1.bf16.msra.mxu0 0
        %593 = vmatprep.subr.bf16.mxu0 0
        %594 = vmatpush1.bf16.msra.mxu0 0
        %595 = vmatprep.subr.bf16.mxu0 0
        %596 = vmatpush1.bf16.msra.mxu0 0
        %597 = vmatprep.subr.bf16.mxu0 0
        %598 = vmatpush1.bf16.msra.mxu0 0
        %599 = vmatprep.subr.bf16.mxu0 0
        %600 = vmatpush1.bf16.msra.mxu0 0
        %601 = vmatprep.subr.bf16.mxu0 0
        %602 = vmatpush1.bf16.msra.mxu0 0
        %603 = vmatprep.subr.bf16.mxu0 0
        %604 = vmatpush1.bf16.msra.mxu0 0
        %605 = vmatprep.subr.bf16.mxu0 0
        %606 = vmatpush1.bf16.msra.mxu0 0
        %607 = vmatprep.subr.bf16.mxu0 0
        %608 = vmatpush1.bf16.msra.mxu0 0
        %609 = vmatprep.subr.bf16.mxu0 0
        %610 = vmatpush1.bf16.msra.mxu0 0
        %611 = vmatprep.subr.bf16.mxu0 0
        %612 = vmatpush1.bf16.msra.mxu0 0
        %613 = vmatprep.subr.bf16.mxu0 0
        %614 = vmatpush1.bf16.msra.mxu0 0
        %615 = vmatprep.subr.bf16.mxu0 0
        %616 = vmatpush1.bf16.msra.mxu0 0
        %617 = vmatprep.mubr.bf16.mxu0 0
        %618 = vmatmul.mubr.bf16.gmra.mrb[0].mxu0 %v580
        %v619 = vpop.f32.mrb[0].mxu0
        %v620 = vadd.f32 0.0, %v619
        %v621 = vpop.f32.mrb[0].mxu0
        %v622 = vpop.f32.mrb[0].mxu0
        %v623 = vpop.f32.mrb[0].mxu0
        %624 = vdwg.mxu0
        %v625 = vadd.f32 %v544, %v620
        %v626 = vlaneseq
        %v627 = vshrl.u32 %v626, 7
        %v628 = vsub.s32 2, %v627
        %v629 = vrot.slane %v326, %v628
        %v632 = vunpack.c.l.s4 1983009808
        %v633 = vunpack.c.0.s8 %v632
        %v634 = vlaneseq
        %v635 = vshrl.u32 %v634, 7
        %v636 = vsub.s32 %v633, %v635
        %v637 = vrot.slane %v629, %v636
        %638 = vrot.lane.b32.xlu0 %v637, 17
        %v639 = vpop.permute.xlu0 %638
        %v640 = vrot.slane %v639, 6
        %vm641 = vcmask 138240
        %v642 = vsel %vm641, %v640, %v639
        %v644 = vmul.bf16 %v313, %v642
        %v647 = vunpack.c.l.s4 1983009808
        %v648 = vunpack.c.0.s8 %v647
        %v649 = vlaneseq
        %v650 = vshrl.u32 %v649, 7
        %v651 = vsub.s32 %v648, %v650
        %v652 = vrot.slane %v644, %v651
        %v653 = vcombine.high %v652, %v652
        %654 = vrot.lane.b32.xlu0 %v652, 111
        %v655 = vpop.permute.xlu0 %654
        %656 = vrot.lane.b32.xlu0 %v653, 111
        %v657 = vpop.permute.xlu0 %656
        %vm658 = vcmask 908288
        %v659 = vsel %vm658, %v655, %v657
        %v661 = vsel %vm370, %v318, 0
        %v664 = vsel %vm374, %v659, 0
        %666 = vmatprep.subr.bf16.mxu0 0
        %667 = vmatpush1.bf16.msra.mxu0 %v664
        %668 = vmatprep.subr.bf16.mxu0 0
        %669 = vmatpush1.bf16.msra.mxu0 0
        %670 = vmatprep.subr.bf16.mxu0 0
        %671 = vmatpush1.bf16.msra.mxu0 0
        %672 = vmatprep.subr.bf16.mxu0 0
        %673 = vmatpush1.bf16.msra.mxu0 0
        %674 = vmatprep.subr.bf16.mxu0 0
        %675 = vmatpush1.bf16.msra.mxu0 0
        %676 = vmatprep.subr.bf16.mxu0 0
        %677 = vmatpush1.bf16.msra.mxu0 0
        %678 = vmatprep.subr.bf16.mxu0 0
        %679 = vmatpush1.bf16.msra.mxu0 0
        %680 = vmatprep.subr.bf16.mxu0 0
        %681 = vmatpush1.bf16.msra.mxu0 0
        %682 = vmatprep.subr.bf16.mxu0 0
        %683 = vmatpush1.bf16.msra.mxu0 0
        %684 = vmatprep.subr.bf16.mxu0 0
        %685 = vmatpush1.bf16.msra.mxu0 0
        %686 = vmatprep.subr.bf16.mxu0 0
        %687 = vmatpush1.bf16.msra.mxu0 0
        %688 = vmatprep.subr.bf16.mxu0 0
        %689 = vmatpush1.bf16.msra.mxu0 0
        %690 = vmatprep.subr.bf16.mxu0 0
        %691 = vmatpush1.bf16.msra.mxu0 0
        %692 = vmatprep.subr.bf16.mxu0 0
        %693 = vmatpush1.bf16.msra.mxu0 0
        %694 = vmatprep.subr.bf16.mxu0 0
        %695 = vmatpush1.bf16.msra.mxu0 0
        %696 = vmatprep.subr.bf16.mxu0 0
        %697 = vmatpush1.bf16.msra.mxu0 0
        %698 = vmatprep.mubr.bf16.mxu0 0
        %699 = vmatmul.mubr.bf16.gmra.mrb[0].mxu0 %v661
        %v700 = vpop.f32.mrb[0].mxu0
        %v701 = vadd.f32 0.0, %v700
        %v702 = vpop.f32.mrb[0].mxu0
        %v703 = vpop.f32.mrb[0].mxu0
        %v704 = vpop.f32.mrb[0].mxu0
        %705 = vdwg.mxu0
        %v706 = vadd.f32 %v625, %v701
        %v707 = vlaneseq
        %v708 = vshrl.u32 %v707, 7
        %v709 = vsub.s32 2, %v708
        %v710 = vrot.slane %v334, %v709
        %v713 = vunpack.c.l.s4 1983009808
        %v714 = vunpack.c.0.s8 %v713
        %v715 = vlaneseq
        %v716 = vshrl.u32 %v715, 7
        %v717 = vsub.s32 %v714, %v716
        %v718 = vrot.slane %v710, %v717
        %719 = vrot.lane.b32.xlu0 %v718, 18
        %v720 = vpop.permute.xlu0 %719
        %v721 = vrot.slane %v720, 6
        %vm722 = vcmask 146432
        %v723 = vsel %vm722, %v721, %v720
        %v725 = vmul.bf16 %v313, %v723
        %v728 = vunpack.c.l.s4 1983009808
        %v729 = vunpack.c.0.s8 %v728
        %v730 = vlaneseq
        %v731 = vshrl.u32 %v730, 7
        %v732 = vsub.s32 %v729, %v731
        %v733 = vrot.slane %v725, %v732
        %v734 = vcombine.high %v733, %v733
        %735 = vrot.lane.b32.xlu0 %v733, 110
        %v736 = vpop.permute.xlu0 %735
        %737 = vrot.lane.b32.xlu0 %v734, 110
        %v738 = vpop.permute.xlu0 %737
        %vm739 = vcmask 900096
        %v740 = vsel %vm739, %v736, %v738
        %v742 = vsel %vm370, %v319, 0
        %v745 = vsel %vm374, %v740, 0
        %747 = vmatprep.subr.bf16.mxu0 0
        %748 = vmatpush1.bf16.msra.mxu0 %v745
        %749 = vmatprep.subr.bf16.mxu0 0
        %750 = vmatpush1.bf16.msra.mxu0 0
        %751 = vmatprep.subr.bf16.mxu0 0
        %752 = vmatpush1.bf16.msra.mxu0 0
        %753 = vmatprep.subr.bf16.mxu0 0
        %754 = vmatpush1.bf16.msra.mxu0 0
        %755 = vmatprep.subr.bf16.mxu0 0
        %756 = vmatpush1.bf16.msra.mxu0 0
        %757 = vmatprep.subr.bf16.mxu0 0
        %758 = vmatpush1.bf16.msra.mxu0 0
        %759 = vmatprep.subr.bf16.mxu0 0
        %760 = vmatpush1.bf16.msra.mxu0 0
        %761 = vmatprep.subr.bf16.mxu0 0
        %762 = vmatpush1.bf16.msra.mxu0 0
        %763 = vmatprep.subr.bf16.mxu0 0
        %764 = vmatpush1.bf16.msra.mxu0 0
        %765 = vmatprep.subr.bf16.mxu0 0
        %766 = vmatpush1.bf16.msra.mxu0 0
        %767 = vmatprep.subr.bf16.mxu0 0
        %768 = vmatpush1.bf16.msra.mxu0 0
        %769 = vmatprep.subr.bf16.mxu0 0
        %770 = vmatpush1.bf16.msra.mxu0 0
        %771 = vmatprep.subr.bf16.mxu0 0
        %772 = vmatpush1.bf16.msra.mxu0 0
        %773 = vmatprep.subr.bf16.mxu0 0
        %774 = vmatpush1.bf16.msra.mxu0 0
        %775 = vmatprep.subr.bf16.mxu0 0
        %776 = vmatpush1.bf16.msra.mxu0 0
        %777 = vmatprep.subr.bf16.mxu0 0
        %778 = vmatpush1.bf16.msra.mxu0 0
        %779 = vmatprep.mubr.bf16.mxu0 0
        %780 = vmatmul.mubr.bf16.gmra.mrb[0].mxu0 %v742
        %v781 = vpop.f32.mrb[0].mxu0
        %v782 = vadd.f32 0.0, %v781
        %v783 = vpop.f32.mrb[0].mxu0
        %v784 = vpop.f32.mrb[0].mxu0
        %v785 = vpop.f32.mrb[0].mxu0
        %786 = vdwg.mxu0
        %v787 = vadd.f32 %v706, %v782
        %v788 = vlaneseq
        %v789 = vshrl.u32 %v788, 7
        %v790 = vsub.s32 3, %v789
        %v791 = vrot.slane %v326, %v790
        %v794 = vunpack.c.l.s4 1983009808
        %v795 = vunpack.c.0.s8 %v794
        %v796 = vlaneseq
        %v797 = vshrl.u32 %v796, 7
        %v798 = vsub.s32 %v795, %v797
        %v799 = vrot.slane %v791, %v798
        %800 = vrot.lane.b32.xlu0 %v799, 32
        %v801 = vpop.permute.xlu0 %800
        %v802 = vrot.slane %v801, 6
        %vm803 = vcmask 261120
        %v804 = vsel %vm803, %v802, %v801
        %v806 = vmul.bf16 %v313, %v804
        %v809 = vunpack.c.l.s4 1983009808
        %v810 = vunpack.c.0.s8 %v809
        %v811 = vlaneseq
        %v812 = vshrl.u32 %v811, 7
        %v813 = vsub.s32 %v810, %v812
        %v814 = vrot.slane %v806, %v813
        %v815 = vcombine.high %v814, %v814
        %816 = vrot.lane.b32.xlu0 %v814, 96
        %v817 = vpop.permute.xlu0 %816
        %818 = vrot.lane.b32.xlu0 %v815, 96
        %v819 = vpop.permute.xlu0 %818
        %vm820 = vcmask 785408
        %v821 = vsel %vm820, %v817, %v819
        %v823 = vsel %vm370, %v320, 0
        %v826 = vsel %vm374, %v821, 0
        %828 = vmatprep.subr.bf16.mxu0 0
        %829 = vmatpush1.bf16.msra.mxu0 %v826
        %830 = vmatprep.subr.bf16.mxu0 0
        %831 = vmatpush1.bf16.msra.mxu0 0
        %832 = vmatprep.subr.bf16.mxu0 0
        %833 = vmatpush1.bf16.msra.mxu0 0
        %834 = vmatprep.subr.bf16.mxu0 0
        %835 = vmatpush1.bf16.msra.mxu0 0
        %836 = vmatprep.subr.bf16.mxu0 0
        %837 = vmatpush1.bf16.msra.mxu0 0
        %838 = vmatprep.subr.bf16.mxu0 0
        %839 = vmatpush1.bf16.msra.mxu0 0
        %840 = vmatprep.subr.bf16.mxu0 0
        %841 = vmatpush1.bf16.msra.mxu0 0
        %842 = vmatprep.subr.bf16.mxu0 0
        %843 = vmatpush1.bf16.msra.mxu0 0
        %844 = vmatprep.subr.bf16.mxu0 0
        %845 = vmatpush1.bf16.msra.mxu0 0
        %846 = vmatprep.subr.bf16.mxu0 0
        %847 = vmatpush1.bf16.msra.mxu0 0
        %848 = vmatprep.subr.bf16.mxu0 0
        %849 = vmatpush1.bf16.msra.mxu0 0
        %850 = vmatprep.subr.bf16.mxu0 0
        %851 = vmatpush1.bf16.msra.mxu0 0
        %852 = vmatprep.subr.bf16.mxu0 0
        %853 = vmatpush1.bf16.msra.mxu0 0
        %854 = vmatprep.subr.bf16.mxu0 0
        %855 = vmatpush1.bf16.msra.mxu0 0
        %856 = vmatprep.subr.bf16.mxu0 0
        %857 = vmatpush1.bf16.msra.mxu0 0
        %858 = vmatprep.subr.bf16.mxu0 0
        %859 = vmatpush1.bf16.msra.mxu0 0
        %860 = vmatprep.mubr.bf16.mxu0 0
        %861 = vmatmul.mubr.bf16.gmra.mrb[0].mxu0 %v823
        %v862 = vpop.f32.mrb[0].mxu0
        %v863 = vadd.f32 0.0, %v862
        %v864 = vpop.f32.mrb[0].mxu0
        %v865 = vpop.f32.mrb[0].mxu0
        %v866 = vpop.f32.mrb[0].mxu0
        %867 = vdwg.mxu0
        %v868 = vadd.f32 %v787, %v863
        %v869 = vlaneseq
        %v870 = vshrl.u32 %v869, 7
        %v871 = vsub.s32 3, %v870
        %v872 = vrot.slane %v334, %v871
        %v875 = vunpack.c.l.s4 1983009808
        %v876 = vunpack.c.0.s8 %v875
        %v877 = vlaneseq
        %v878 = vshrl.u32 %v877, 7
        %v879 = vsub.s32 %v876, %v878
        %v880 = vrot.slane %v872, %v879
        %881 = vrot.lane.b32.xlu0 %v880, 33
        %v882 = vpop.permute.xlu0 %881
        %v883 = vrot.slane %v882, 6
        %vm884 = vcmask 269312
        %v885 = vsel %vm884, %v883, %v882
        %v887 = vmul.bf16 %v313, %v885
        %v890 = vunpack.c.l.s4 1983009808
        %v891 = vunpack.c.0.s8 %v890
        %v892 = vlaneseq
        %v893 = vshrl.u32 %v892, 7
        %v894 = vsub.s32 %v891, %v893
        %v895 = vrot.slane %v887, %v894
        %v896 = vcombine.high %v895, %v895
        %897 = vrot.lane.b32.xlu0 %v895, 95
        %v898 = vpop.permute.xlu0 %897
        %899 = vrot.lane.b32.xlu0 %v896, 95
        %v900 = vpop.permute.xlu0 %899
        %vm901 = vcmask 777216
        %v902 = vsel %vm901, %v898, %v900
        %v904 = vsel %vm370, %v321, 0
        %v907 = vsel %vm374, %v902, 0
        %909 = vmatprep.subr.bf16.mxu0 0
        %910 = vmatpush1.bf16.msra.mxu0 %v907
        %911 = vmatprep.subr.bf16.mxu0 0
        %912 = vmatpush1.bf16.msra.mxu0 0
        %913 = vmatprep.subr.bf16.mxu0 0
        %914 = vmatpush1.bf16.msra.mxu0 0
        %915 = vmatprep.subr.bf16.mxu0 0
        %916 = vmatpush1.bf16.msra.mxu0 0
        %917 = vmatprep.subr.bf16.mxu0 0
        %918 = vmatpush1.bf16.msra.mxu0 0
        %919 = vmatprep.subr.bf16.mxu0 0
        %920 = vmatpush1.bf16.msra.mxu0 0
        %921 = vmatprep.subr.bf16.mxu0 0
        %922 = vmatpush1.bf16.msra.mxu0 0
        %923 = vmatprep.subr.bf16.mxu0 0
        %924 = vmatpush1.bf16.msra.mxu0 0
        %925 = vmatprep.subr.bf16.mxu0 0
        %926 = vmatpush1.bf16.msra.mxu0 0
        %927 = vmatprep.subr.bf16.mxu0 0
        %928 = vmatpush1.bf16.msra.mxu0 0
        %929 = vmatprep.subr.bf16.mxu0 0
        %930 = vmatpush1.bf16.msra.mxu0 0
        %931 = vmatprep.subr.bf16.mxu0 0
        %932 = vmatpush1.bf16.msra.mxu0 0
        %933 = vmatprep.subr.bf16.mxu0 0
        %934 = vmatpush1.bf16.msra.mxu0 0
        %935 = vmatprep.subr.bf16.mxu0 0
        %936 = vmatpush1.bf16.msra.mxu0 0
        %937 = vmatprep.subr.bf16.mxu0 0
        %938 = vmatpush1.bf16.msra.mxu0 0
        %939 = vmatprep.subr.bf16.mxu0 0
        %940 = vmatpush1.bf16.msra.mxu0 0
        %941 = vmatprep.mubr.bf16.mxu0 0
        %942 = vmatmul.mubr.bf16.gmra.mrb[0].mxu0 %v904
        %v943 = vpop.f32.mrb[0].mxu0
        %v944 = vadd.f32 0.0, %v943
        %v945 = vpop.f32.mrb[0].mxu0
        %v946 = vpop.f32.mrb[0].mxu0
        %v947 = vpop.f32.mrb[0].mxu0
        %948 = vdwg.mxu0
        %v949 = vadd.f32 %v868, %v944
        %v951 = vpack.i.b16 %v324, %v324
        %v953 = vlaneseq
        %v954 = vshrl.u32 %v953, 7
        %v955 = vsub.s32 0, %v954
        %v956 = vrot.slane %v951, %v955
        %v959 = vunpack.c.l.s4 1983009808
        %v960 = vunpack.c.0.s8 %v959
        %v961 = vlaneseq
        %v962 = vshrl.u32 %v961, 7
        %v963 = vsub.s32 %v960, %v962
        %v964 = vrot.slane %v956, %v963
        %965 = vrot.lane.b32.xlu0 %v964, 34
        %v966 = vpop.permute.xlu0 %965
        %v967 = vrot.slane %v966, 6
        %vm968 = vcmask 277504
        %v969 = vsel %vm968, %v967, %v966
        %v971 = vmul.bf16 %v313, %v969
        %v974 = vunpack.c.l.s4 1983009808
        %v975 = vunpack.c.0.s8 %v974
        %v976 = vlaneseq
        %v977 = vshrl.u32 %v976, 7
        %v978 = vsub.s32 %v975, %v977
        %v979 = vrot.slane %v971, %v978
        %v980 = vcombine.high %v979, %v979
        %981 = vrot.lane.b32.xlu0 %v979, 94
        %v982 = vpop.permute.xlu0 %981
        %983 = vrot.lane.b32.xlu0 %v980, 94
        %v984 = vpop.permute.xlu0 %983
        %vm985 = vcmask 769024
        %v986 = vsel %vm985, %v982, %v984
        %v988 = vsel %vm370, %v322, 0
        %v991 = vsel %vm374, %v986, 0
        %993 = vmatprep.subr.bf16.mxu0 0
        %994 = vmatpush1.bf16.msra.mxu0 %v991
        %995 = vmatprep.subr.bf16.mxu0 0
        %996 = vmatpush1.bf16.msra.mxu0 0
        %997 = vmatprep.subr.bf16.mxu0 0
        %998 = vmatpush1.bf16.msra.mxu0 0
        %999 = vmatprep.subr.bf16.mxu0 0
        %1000 = vmatpush1.bf16.msra.mxu0 0
        %1001 = vmatprep.subr.bf16.mxu0 0
        %1002 = vmatpush1.bf16.msra.mxu0 0
        %1003 = vmatprep.subr.bf16.mxu0 0
        %1004 = vmatpush1.bf16.msra.mxu0 0
        %1005 = vmatprep.subr.bf16.mxu0 0
        %1006 = vmatpush1.bf16.msra.mxu0 0
        %1007 = vmatprep.subr.bf16.mxu0 0
        %1008 = vmatpush1.bf16.msra.mxu0 0
        %1009 = vmatprep.subr.bf16.mxu0 0
        %1010 = vmatpush1.bf16.msra.mxu0 0
        %1011 = vmatprep.subr.bf16.mxu0 0
        %1012 = vmatpush1.bf16.msra.mxu0 0
        %1013 = vmatprep.subr.bf16.mxu0 0
        %1014 = vmatpush1.bf16.msra.mxu0 0
        %1015 = vmatprep.subr.bf16.mxu0 0
        %1016 = vmatpush1.bf16.msra.mxu0 0
        %1017 = vmatprep.subr.bf16.mxu0 0
        %1018 = vmatpush1.bf16.msra.mxu0 0
        %1019 = vmatprep.subr.bf16.mxu0 0
        %1020 = vmatpush1.bf16.msra.mxu0 0
        %1021 = vmatprep.subr.bf16.mxu0 0
        %1022 = vmatpush1.bf16.msra.mxu0 0
        %1023 = vmatprep.subr.bf16.mxu0 0
        %1024 = vmatpush1.bf16.msra.mxu0 0
        %1025 = vmatprep.mubr.bf16.mxu0 0
        %1026 = vmatmul.mubr.bf16.gmra.mrb[0].mxu0 %v988
        %v1027 = vpop.f32.mrb[0].mxu0
        %v1028 = vadd.f32 0.0, %v1027
        %v1029 = vpop.f32.mrb[0].mxu0
        %v1030 = vpop.f32.mrb[0].mxu0
        %v1031 = vpop.f32.mrb[0].mxu0
        %1032 = vdwg.mxu0
        %v1033 = vadd.f32 %v949, %v1028
        %v1034 = vpack.c.bf16 %v1033, %v1033
        %1035 = vst [vmem:[%s261] sm:$0xf] %v1034
        %1036 = vadd.xlane.f32.xlu0 %v1033
        %v1037 = vpop.xlane.xlu0 %1036
        %vm1038 = vcmask 7168
        %1039 = vst.msk [vmem:[%s303] sm:$0xff] %vm1038, %v1037
        %v1040 = vmul.f32 %v1033, %v1033
        %1041 = vadd.xlane.f32.xlu0 %v1040
        %v1042 = vpop.xlane.xlu0 %1041
        %1043 = vst.msk [vmem:[%s311] sm:$0xff] %vm1038, %v1042
        %s1044 = sand.u32 %s117, 1
        %s1045 = scalar_lea.sflag [#allocation3], %s1044
        %s1046 = sand.u32 %s117, 1
        %s1047 = smul.addr %s1046, 4
        %s1048 = scalar_lea.vmem [#allocation2], %s1047
        %p1049 = scmp.lt.s32.totalorder %s24, 1
        %s1050 = scalar_select %p1049, %s24, 1
        %p1051 = scmp.lt.s32.totalorder %s25, 1
        %s1052 = scalar_select %p1051, %s25, 1
        %s1053 = smul.addr %s1050, 2
        %s1054 = sadd.s32 %s1052, %s1053
        %s1055 = smul.addr %s1054, 8
        %s1056 = scalar_lea.vmem %s4, %s1055
        %p1057 = scmp.lt.s32.totalorder %s24, 1
        %s1058 = scalar_select %p1057, %s24, 1
        %p1059 = scmp.lt.s32.totalorder %s25, 1
        %s1060 = scalar_select %p1059, %s25, 1
        %s1061 = smul.addr %s1058, 2
        %s1062 = sadd.s32 %s1060, %s1061
        %s1063 = smul.addr %s1062, 8
        %s1064 = scalar_lea.vmem %s5, %s1063
        // Predicated region
        $region33: #{tpu_custom_call.1} parent=31 // pred_check
          %p1065 = pneg %p127
        $region34: #{tpu_custom_call.1} parent=31 // pred_check_branch
          %1067 = sbr.rel (%p1065) target = $region36
        $region35: #{tpu_custom_call.1} parent=31 // pred_region
          %s1069 = ssub.s32 64, 64
          %1070 = vsyncadd %s1045, %s1069
          %s1071 = smul.addr %s24, 2
          %s1072 = sadd.s32 %s25, %s1071
          %s1073 = smul.addr %s1072, 64
          %s1074 = scalar_lea.hbm %s3, %s1073
          %s1076 = sshll.u32 %s1048, 4
          %s1077 = int_to_ptr.vmem [resolvable:$true] %s1076
          %1079 = dma.vmem_to_hbm [thread:$0]  %s1077, 64, %s1074, %s1045
        $region36: #{tpu_custom_call.1} parent=31 // pred_fallthru
          _
        // Predicated region
        $region37: #{tpu_custom_call.1} parent=31 // pred_check
          %p1080 = pneg %p155
        $region38: #{tpu_custom_call.1} parent=31 // pred_check_branch
          %1082 = sbr.rel (%p1080) target = $region40
        $region39: #{tpu_custom_call.1} parent=31 // pred_region
          _
        $region40: #{tpu_custom_call.1} parent=31 // pred_fallthru
          _
        // Predicated region
        $region41: #{tpu_custom_call.1} parent=31 // pred_check
          %p1083 = pneg %p183
        $region42: #{tpu_custom_call.1} parent=31 // pred_check_branch
          %1085 = sbr.rel (%p1083) target = $region44
        $region43: #{tpu_custom_call.1} parent=31 // pred_region
          _
        $region44: #{tpu_custom_call.1} parent=31 // pred_fallthru
          _
      $region32: #{tpu_custom_call.1} parent=5 // pred_fallthru
        _
      %p1086 = scmp.le.s32.totalorder 2, %s15
      // Predicated region
      $region45: #{tpu_custom_call.1} parent=5 // pred_check
        %p1087 = pneg %p1086
      $region46: #{tpu_custom_call.1} parent=5 // pred_check_branch
        %1089 = sbr.rel (%p1087) target = $region48
      $region47: #{tpu_custom_call.1} parent=5 // pred_region
        %s1090 = ssub.s32 %s15, 2
        // Predicated region
        $region49: #{tpu_custom_call.1} parent=47 // pred_check
          %p1091 = pneg %p133
        $region50: #{tpu_custom_call.1} parent=47 // pred_check_branch
          %1093 = sbr.rel (%p1091) target = $region52
        $region51: #{tpu_custom_call.1} parent=47 // pred_region
          %s1094 = sand.u32 %s118, 1
          %s1095 = scalar_lea.sflag [#allocation3], %s1094
          %s1096 = sand.u32 %s118, 1
          %s1097 = smul.addr %s1096, 4
          %s1098 = scalar_lea.vmem [#allocation2], %s1097
          %1099 = dma.done %s1095, 64
        $region52: #{tpu_custom_call.1} parent=47 // pred_fallthru
          _
        // Predicated region
        $region53: #{tpu_custom_call.1} parent=47 // pred_check
          %p1100 = pneg %p161
        $region54: #{tpu_custom_call.1} parent=47 // pred_check_branch
          %1102 = sbr.rel (%p1100) target = $region56
        $region55: #{tpu_custom_call.1} parent=47 // pred_region
          %p1103 = scmp.lt.s32.totalorder %s26, 1
          %s1104 = scalar_select %p1103, %s26, 1
          %p1105 = scmp.lt.s32.totalorder %s27, 1
          %s1106 = scalar_select %p1105, %s27, 1
          %s1107 = smul.addr %s1104, 2
          %s1108 = sadd.s32 %s1106, %s1107
          %s1109 = smul.addr %s1108, 8
          %s1110 = scalar_lea.vmem %s4, %s1109
        $region56: #{tpu_custom_call.1} parent=47 // pred_fallthru
          _
        // Predicated region
        $region57: #{tpu_custom_call.1} parent=47 // pred_check
          %p1111 = pneg %p189
        $region58: #{tpu_custom_call.1} parent=47 // pred_check_branch
          %1113 = sbr.rel (%p1111) target = $region60
        $region59: #{tpu_custom_call.1} parent=47 // pred_region
          %p1114 = scmp.lt.s32.totalorder %s26, 1
          %s1115 = scalar_select %p1114, %s26, 1
          %p1116 = scmp.lt.s32.totalorder %s27, 1
          %s1117 = scalar_select %p1116, %s27, 1
          %s1118 = smul.addr %s1115, 2
          %s1119 = sadd.s32 %s1117, %s1118
          %s1120 = smul.addr %s1119, 8
          %s1121 = scalar_lea.vmem %s5, %s1120
        $region60: #{tpu_custom_call.1} parent=47 // pred_fallthru
          _
      $region48: #{tpu_custom_call.1} parent=5 // pred_fallthru
        _
    $region6: #{tpu_custom_call.1} parent=1 // loop_footer
      %s19 = sadd.s32 1, %s15
    $region7: #{tpu_custom_call.1} parent=1 // loop_footer_branch
      %14 = sbr.rel target = $region3
    $region8: #{tpu_custom_call.1} parent=1 // loop_exit
      _
    %1122 = vsyncpa [#allocation3], 1
    %s1123 = scalar_lea.sflag [#allocation3], 1
    %1124 = vsyncpa %s1123, 1

</llo_original>
